<compile_context>
chip_gen: v7x
topology: tpu7x:2x2x1
jax: 0.10.0
libtpu: 0.0.40
codegen_flags: <defaults>
</compile_context>

<pallas_src>
import math

import jax
import jax.numpy as jnp
from jax.experimental import pallas as pl
from jax.experimental.pallas import tpu as pltpu

LN_EPS = 1e-5          # torch.nn.LayerNorm default
_LANES = 128           # TPU lane width
_ROW_ALIGN = 16        # bf16 sublane tile (covers f32's 8 too)
_MAX_TILE_N = 4096     # hard cap on the row tile
_ROW_VMEM_BUDGET = 24 * 1024 * 1024   # bytes for row-proportional buffers


def _round_up(x, m):
    return ((x + m - 1) // m) * m


def _cdiv(a, b):
    return -(-a // b)


def _choose_row_tiling(n, max_feat_pad):
    """Pick (tile_n, n_pad) for the row grid.

    Large tiles amortize per-step overhead; >= 2 steps (when possible) lets v7x
    shard rows across its 2 TensorCores; deriving tile_n from cdiv(n, steps)
    keeps row padding < tile_n; the VMEM budget keeps f32 intermediates plus
    double-buffered I/O tiles well under v7x's 64 MiB physical VMEM.
    """
    budget_rows = _ROW_VMEM_BUDGET // (6 * 4 * max_feat_pad)
    max_tile = max(_ROW_ALIGN, min(_MAX_TILE_N, (budget_rows // _ROW_ALIGN) * _ROW_ALIGN))
    num_steps = max(2, _cdiv(_round_up(n, _ROW_ALIGN), max_tile))
    tile_n = max(_ROW_ALIGN, min(max_tile, _round_up(_cdiv(n, num_steps), _ROW_ALIGN)))
    n_pad = _round_up(n, tile_n)
    return tile_n, n_pad


# ---------------------------------------------------------------------------
# Fused kernel (generated for a given tuple of REAL hidden widths)
# ---------------------------------------------------------------------------
def _make_fused_kernel(real_hidden_sizes):
    """Ref order: x, [w, bias_gamma_beta] * L, w_out, b_out, out."""

    def kernel(*refs):
        x_ref, out_ref = refs[0], refs[-1]
        h = x_ref[...]                                     # bf16 (tile_n, obs_pad)
        idx = 1
        for real_h in real_hidden_sizes:
            w_ref, v_ref = refs[idx], refs[idx + 1]
            idx += 2
            # Linear: bf16 x bf16 on the MXU, f32 accumulation.
            z = jnp.dot(h, w_ref[...], preferred_element_type=jnp.float32)
            z = z + v_ref[0:1, :]                          # bias (f32)
            # LayerNorm over the REAL width (padded lanes of z are exactly 0).
            h_pad = z.shape[-1]
            inv_f = 1.0 / real_h
            mean = jnp.sum(z, axis=-1, keepdims=True) * inv_f
            zc = z - mean
            if real_h != h_pad:                            # mask pad lanes from variance
                lane = jax.lax.broadcasted_iota(jnp.int32, (1, h_pad), 1)
                zc = jnp.where(lane < real_h, zc, 0.0)
            var = jnp.sum(zc * zc, axis=-1, keepdims=True) * inv_f
            zn = zc * jax.lax.rsqrt(var + LN_EPS)
            # Affine (gamma/beta are 0 in padded lanes) + ReLU, back to bf16.
            h = jnp.maximum(zn * v_ref[1:2, :] + v_ref[2:3, :], 0.0).astype(jnp.bfloat16)

        w_ref, b_ref = refs[idx], refs[idx + 1]            # fused [last, 2A] head
        out_ref[...] = (
            jnp.dot(h, w_ref[...], preferred_element_type=jnp.float32) + b_ref[...]
        ).astype(out_ref.dtype)

    return kernel


def _resident_spec(shape):
    # Full-array block, same (0,0) block index every step -> stays resident.
    return pl.BlockSpec(shape, lambda i: (0, 0))


# ---------------------------------------------------------------------------
# pallas_call wrapper: one fused call over a row grid
# ---------------------------------------------------------------------------
def _fused_mlp(x, params):
    n, obs_dim = x.shape
    hidden = params["hidden"]
    real_hidden = tuple(int(layer["w"].shape[1]) for layer in hidden)
    two_a = int(params["w_out"].shape[1])

    obs_pad = _round_up(obs_dim, _LANES)
    out_pad = _round_up(two_a, _LANES)
    h_pads = tuple(_round_up(h, _LANES) for h in real_hidden)
    max_feat = max((obs_pad, out_pad) + h_pads)

    tile_n, n_pad = _choose_row_tiling(n, max_feat)
    grid = (n_pad // tile_n,)

    # --- operand prep (lane padding / packing / bf16 casts). In production,
    # hoist the parameter prep out of the per-step forward (once per update).
    x_p = jnp.pad(x.astype(jnp.bfloat16), ((0, n_pad - n), (0, obs_pad - obs_dim)))

    in_arrays = [x_p]
    in_specs = [pl.BlockSpec((tile_n, obs_pad), lambda i: (i, 0))]

    last_pad, last_real = obs_pad, obs_dim
    for layer, h_real, h_pad in zip(hidden, real_hidden, h_pads):
        w = jnp.pad(layer["w"].astype(jnp.bfloat16),
                    ((0, last_pad - last_real), (0, h_pad - h_real)))
        vec = jnp.stack([layer["b"], layer["gamma"], layer["beta"]], axis=0)
        vec = jnp.pad(vec.astype(jnp.float32), ((0, 0), (0, h_pad - h_real)))
        in_arrays += [w, vec]
        in_specs += [_resident_spec(w.shape), _resident_spec(vec.shape)]
        last_pad, last_real = h_pad, h_real

    w_out = jnp.pad(params["w_out"].astype(jnp.bfloat16),
                    ((0, last_pad - last_real), (0, out_pad - two_a)))
    b_out = jnp.pad(params["b_out"].astype(jnp.float32),
                    ((0, out_pad - two_a),)).reshape(1, out_pad)
    in_arrays += [w_out, b_out]
    in_specs += [_resident_spec(w_out.shape), _resident_spec(b_out.shape)]

    # Advisory cost estimate for XLA's scheduler.
    flops = 0
    last = obs_pad
    for h_pad in h_pads:
        flops += 2 * n_pad * last * h_pad + 8 * n_pad * h_pad
        last = h_pad
    flops += 2 * n_pad * last * out_pad
    transcendentals = n_pad * len(h_pads)
    param_bytes = sum(int(a.size) * a.dtype.itemsize for a in in_arrays[1:])
    bytes_accessed = int(x_p.size) * 2 + param_bytes + n_pad * out_pad * 4

    out = pl.pallas_call(
        _make_fused_kernel(real_hidden),
        out_shape=jax.ShapeDtypeStruct((n_pad, out_pad), jnp.float32),
        grid=grid,
        in_specs=in_specs,
        out_specs=pl.BlockSpec((tile_n, out_pad), lambda i: (i, 0)),
        compiler_params=pltpu.CompilerParams(
            dimension_semantics=("parallel",),
            # 48 MiB: raises v5e's small default scoped limit, still leaves
            # headroom on v7x's 64 MiB physical VMEM.
            vmem_limit_bytes=48 * 1024 * 1024,
        ),
        cost_estimate=pl.CostEstimate(
            flops=int(flops),
            transcendentals=int(transcendentals),
            bytes_accessed=int(bytes_accessed),
        ),
    )(*in_arrays)

    return out[:n]


# ---------------------------------------------------------------------------
# Model: parameter init + forward
# ---------------------------------------------------------------------------
def init_pi_mlp_params(key, obs_dim, hidden_sizes, action_size):
    """Array-only pytree mimicking torch.nn.Linear default init
    (uniform(-1/sqrt(fan_in), +1/sqrt(fan_in))). Weights stored transposed vs
    PyTorch, i.e. [in_features, out_features]; the head is the module's single
    Linear(last, 2*action_size)."""
    hidden = []
    last = obs_dim
    for h in hidden_sizes:
        key, kw, kb = jax.random.split(key, 3)
        bound = 1.0 / math.sqrt(last)
        hidden.append({
            "w": jax.random.uniform(kw, (last, h), jnp.float32, -bound, bound),
            "b": jax.random.uniform(kb, (h,), jnp.float32, -bound, bound),
            "gamma": jnp.ones((h,), jnp.float32),   # LayerNorm weight
            "beta": jnp.zeros((h,), jnp.float32),   # LayerNorm bias
        })
        last = h
    key, kw, kb = jax.random.split(key, 3)
    bound = 1.0 / math.sqrt(last)
    return {
        "hidden": tuple(hidden),
        "w_out": jax.random.uniform(kw, (last, 2 * action_size), jnp.float32, -bound, bound),
        "b_out": jax.random.uniform(kb, (2 * action_size,), jnp.float32, -bound, bound),
    }


@jax.jit
def pi_mlp_forward(observation, params):
    """observation: [T, B, obs_dim] -> (mu [T, B, A], log_std [T, B, A])."""
    t, b, obs_dim = observation.shape
    a = params["w_out"].shape[1] // 2
    out = _fused_mlp(observation.reshape(t * b, obs_dim), params)
    mu = out[:, :a].reshape(t, b, a)
    log_std = out[:, a:2 * a].reshape(t, b, a)
    return mu, log_std


# ---------------------------------------------------------------------------
# Pure-JAX f32 reference (torch semantics) for a correctness check
# ---------------------------------------------------------------------------
def pi_mlp_forward_ref(observation, params):
    t, b, obs_dim = observation.shape
    x = observation.reshape(t * b, obs_dim).astype(jnp.float32)
    for layer in params["hidden"]:
        h = x @ layer["w"] + layer["b"]
        mean = jnp.mean(h, axis=-1, keepdims=True)
        var = jnp.mean((h - mean) ** 2, axis=-1, keepdims=True)
        h = (h - mean) * jax.lax.rsqrt(var + LN_EPS) * layer["gamma"] + layer["beta"]
        x = jnp.maximum(h, 0.0)
    out = x @ params["w_out"] + params["b_out"]
    a = out.shape[1] // 2
    return out[:, :a].reshape(t, b, a), out[:, a:].reshape(t, b, a)


if __name__ == "__main__":
    # Small shapes consistent with the module.
    T, B = 2, 3
    obs_dim = 16
    hidden_sizes = (32, 32)
    action_size = 4

    key = jax.random.PRNGKey(0)
    key, k_obs = jax.random.split(key)
    observation = jax.random.normal(k_obs, (T, B, obs_dim), jnp.float32)

    params = init_pi_mlp_params(key, obs_dim, hidden_sizes, action_size)

    mu, log_std = pi_mlp_forward(observation, params)
    jax.block_until_ready((mu, log_std))

    mu_ref, log_std_ref = pi_mlp_forward_ref(observation, params)
    assert mu.shape == (T, B, action_size)
    assert log_std.shape == (T, B, action_size)
    # bf16 matmul path -> compare against the f32 reference with loose tolerance.
    assert jnp.allclose(mu, mu_ref, atol=5e-2, rtol=5e-2), float(jnp.max(jnp.abs(mu - mu_ref)))
    assert jnp.allclose(log_std, log_std_ref, atol=5e-2, rtol=5e-2), float(
        jnp.max(jnp.abs(log_std - log_std_ref)))

    print("KERNEL_OK")
</pallas_src>

<mosaic_0001>
module attributes {stable_mosaic.version = 11 : i64} {
  func.func @kernel(%arg0: i32, %arg1: memref<16x128xbf16, #tpu.memory_space<vmem>>, %arg2: memref<128x128xbf16, #tpu.memory_space<vmem>>, %arg3: memref<3x128xf32, #tpu.memory_space<vmem>>, %arg4: memref<128x128xbf16, #tpu.memory_space<vmem>>, %arg5: memref<3x128xf32, #tpu.memory_space<vmem>>, %arg6: memref<128x128xbf16, #tpu.memory_space<vmem>>, %arg7: memref<1x128xf32, #tpu.memory_space<vmem>>, %arg8: memref<16x128xf32, #tpu.memory_space<vmem>>) attributes {dimension_semantics = [#tpu.dimension_semantics<parallel>], iteration_bounds = array<i64: 1>, scalar_prefetch = 0 : i64, scratch_operands = 0 : i64, tpu.core_type = #tpu.core_type<tc>, window_params = [{transform_indices = @transform_0, window_bounds = array<i64: 16, 128>}, {pipeline_mode = #tpu.pipeline_mode<synchronous>, transform_indices = @transform_1, window_bounds = array<i64: 128, 128>}, {pipeline_mode = #tpu.pipeline_mode<synchronous>, transform_indices = @transform_2, window_bounds = array<i64: 3, 128>}, {pipeline_mode = #tpu.pipeline_mode<synchronous>, transform_indices = @transform_3, window_bounds = array<i64: 128, 128>}, {pipeline_mode = #tpu.pipeline_mode<synchronous>, transform_indices = @transform_4, window_bounds = array<i64: 3, 128>}, {pipeline_mode = #tpu.pipeline_mode<synchronous>, transform_indices = @transform_5, window_bounds = array<i64: 128, 128>}, {pipeline_mode = #tpu.pipeline_mode<synchronous>, transform_indices = @transform_6, window_bounds = array<i64: 1, 128>}, {transform_indices = @transform_7, window_bounds = array<i64: 16, 128>}]} {
    %c0 = arith.constant 0 : index
    %c0_0 = arith.constant 0 : index
    %0 = vector.load %arg1[%c0, %c0_0] : memref<16x128xbf16, #tpu.memory_space<vmem>>, vector<16x128xbf16>
    %c0_1 = arith.constant 0 : index
    %c0_2 = arith.constant 0 : index
    %1 = vector.load %arg2[%c0_1, %c0_2] : memref<128x128xbf16, #tpu.memory_space<vmem>>, vector<128x128xbf16>
    %cst = arith.constant dense<0.000000e+00> : vector<16x128xf32>
    %2 = tpu.matmul %0, %1, %cst {dimension_numbers = #tpu.dot_dimension_numbers<[1], [0], [0], [1], [0, 0, 1, 1], [], []>} : vector<16x128xbf16>, vector<128x128xbf16>, vector<16x128xf32> -> vector<16x128xf32>
    %c0_3 = arith.constant 0 : index
    %c0_4 = arith.constant 0 : index
    %3 = vector.load %arg3[%c0_3, %c0_4] : memref<3x128xf32, #tpu.memory_space<vmem>>, vector<1x128xf32>
    %4 = vector.broadcast %3 : vector<1x128xf32> to vector<16x128xf32>
    %5 = arith.addf %2, %4 : vector<16x128xf32>
    %cst_5 = arith.constant dense<0.000000e+00> : vector<16xf32>
    %6 = vector.multi_reduction <add>, %5, %cst_5 [1] : vector<16x128xf32> to vector<16xf32>
    %7 = vector.shape_cast %6 : vector<16xf32> to vector<16x1xf32>
    %cst_6 = arith.constant 3.125000e-02 : f32
    %8 = vector.broadcast %cst_6 : f32 to vector<16x1xf32>
    %9 = arith.mulf %7, %8 : vector<16x1xf32>
    %10 = vector.broadcast %9 : vector<16x1xf32> to vector<16x128xf32>
    %11 = arith.subf %5, %10 : vector<16x128xf32>
    %12 = tpu.iota {dimensions = array<i32: 1>} : vector<1x128xi32>
    %c32_i32 = arith.constant 32 : i32
    %13 = vector.broadcast %c32_i32 : i32 to vector<1x128xi32>
    %14 = arith.cmpi slt, %12, %13 : vector<1x128xi32>
    %cst_7 = arith.constant 0.000000e+00 : f32
    %15 = vector.shape_cast %14 : vector<1x128xi1> to vector<1x128xi1>
    %16 = vector.broadcast %15 : vector<1x128xi1> to vector<16x128xi1>
    %17 = vector.broadcast %cst_7 : f32 to vector<16x128xf32>
    %18 = arith.select %16, %11, %17 : vector<16x128xi1>, vector<16x128xf32>
    %19 = arith.mulf %18, %18 : vector<16x128xf32>
    %cst_8 = arith.constant dense<0.000000e+00> : vector<16xf32>
    %20 = vector.multi_reduction <add>, %19, %cst_8 [1] : vector<16x128xf32> to vector<16xf32>
    %21 = vector.shape_cast %20 : vector<16xf32> to vector<16x1xf32>
    %cst_9 = arith.constant 3.125000e-02 : f32
    %22 = vector.broadcast %cst_9 : f32 to vector<16x1xf32>
    %23 = arith.mulf %21, %22 : vector<16x1xf32>
    %cst_10 = arith.constant 9.99999974E-6 : f32
    %24 = vector.broadcast %cst_10 : f32 to vector<16x1xf32>
    %25 = arith.addf %23, %24 : vector<16x1xf32>
    %26 = math.rsqrt %25 : vector<16x1xf32>
    %27 = vector.broadcast %26 : vector<16x1xf32> to vector<16x128xf32>
    %28 = arith.mulf %18, %27 : vector<16x128xf32>
    %c1 = arith.constant 1 : index
    %c0_11 = arith.constant 0 : index
    %29 = vector.load %arg3[%c1, %c0_11] : memref<3x128xf32, #tpu.memory_space<vmem>>, vector<1x128xf32>
    %30 = vector.broadcast %29 : vector<1x128xf32> to vector<16x128xf32>
    %31 = arith.mulf %28, %30 : vector<16x128xf32>
    %c2 = arith.constant 2 : index
    %c0_12 = arith.constant 0 : index
    %32 = vector.load %arg3[%c2, %c0_12] : memref<3x128xf32, #tpu.memory_space<vmem>>, vector<1x128xf32>
    %33 = vector.broadcast %32 : vector<1x128xf32> to vector<16x128xf32>
    %34 = arith.addf %31, %33 : vector<16x128xf32>
    %cst_13 = arith.constant 0.000000e+00 : f32
    %35 = vector.broadcast %cst_13 : f32 to vector<16x128xf32>
    %36 = arith.maximumf %34, %35 : vector<16x128xf32>
    %37 = arith.truncf %36 : vector<16x128xf32> to vector<16x128xbf16>
    %c0_14 = arith.constant 0 : index
    %c0_15 = arith.constant 0 : index
    %38 = vector.load %arg4[%c0_14, %c0_15] : memref<128x128xbf16, #tpu.memory_space<vmem>>, vector<128x128xbf16>
    %cst_16 = arith.constant dense<0.000000e+00> : vector<16x128xf32>
    %39 = tpu.matmul %37, %38, %cst_16 {dimension_numbers = #tpu.dot_dimension_numbers<[1], [0], [0], [1], [0, 0, 1, 1], [], []>} : vector<16x128xbf16>, vector<128x128xbf16>, vector<16x128xf32> -> vector<16x128xf32>
    %c0_17 = arith.constant 0 : index
    %c0_18 = arith.constant 0 : index
    %40 = vector.load %arg5[%c0_17, %c0_18] : memref<3x128xf32, #tpu.memory_space<vmem>>, vector<1x128xf32>
    %41 = vector.broadcast %40 : vector<1x128xf32> to vector<16x128xf32>
    %42 = arith.addf %39, %41 : vector<16x128xf32>
    %cst_19 = arith.constant dense<0.000000e+00> : vector<16xf32>
    %43 = vector.multi_reduction <add>, %42, %cst_19 [1] : vector<16x128xf32> to vector<16xf32>
    %44 = vector.shape_cast %43 : vector<16xf32> to vector<16x1xf32>
    %cst_20 = arith.constant 3.125000e-02 : f32
    %45 = vector.broadcast %cst_20 : f32 to vector<16x1xf32>
    %46 = arith.mulf %44, %45 : vector<16x1xf32>
    %47 = vector.broadcast %46 : vector<16x1xf32> to vector<16x128xf32>
    %48 = arith.subf %42, %47 : vector<16x128xf32>
    %49 = tpu.iota {dimensions = array<i32: 1>} : vector<1x128xi32>
    %c32_i32_21 = arith.constant 32 : i32
    %50 = vector.broadcast %c32_i32_21 : i32 to vector<1x128xi32>
    %51 = arith.cmpi slt, %49, %50 : vector<1x128xi32>
    %cst_22 = arith.constant 0.000000e+00 : f32
    %52 = vector.shape_cast %51 : vector<1x128xi1> to vector<1x128xi1>
    %53 = vector.broadcast %52 : vector<1x128xi1> to vector<16x128xi1>
    %54 = vector.broadcast %cst_22 : f32 to vector<16x128xf32>
    %55 = arith.select %53, %48, %54 : vector<16x128xi1>, vector<16x128xf32>
    %56 = arith.mulf %55, %55 : vector<16x128xf32>
    %cst_23 = arith.constant dense<0.000000e+00> : vector<16xf32>
    %57 = vector.multi_reduction <add>, %56, %cst_23 [1] : vector<16x128xf32> to vector<16xf32>
    %58 = vector.shape_cast %57 : vector<16xf32> to vector<16x1xf32>
    %cst_24 = arith.constant 3.125000e-02 : f32
    %59 = vector.broadcast %cst_24 : f32 to vector<16x1xf32>
    %60 = arith.mulf %58, %59 : vector<16x1xf32>
    %cst_25 = arith.constant 9.99999974E-6 : f32
    %61 = vector.broadcast %cst_25 : f32 to vector<16x1xf32>
    %62 = arith.addf %60, %61 : vector<16x1xf32>
    %63 = math.rsqrt %62 : vector<16x1xf32>
    %64 = vector.broadcast %63 : vector<16x1xf32> to vector<16x128xf32>
    %65 = arith.mulf %55, %64 : vector<16x128xf32>
    %c1_26 = arith.constant 1 : index
    %c0_27 = arith.constant 0 : index
    %66 = vector.load %arg5[%c1_26, %c0_27] : memref<3x128xf32, #tpu.memory_space<vmem>>, vector<1x128xf32>
    %67 = vector.broadcast %66 : vector<1x128xf32> to vector<16x128xf32>
    %68 = arith.mulf %65, %67 : vector<16x128xf32>
    %c2_28 = arith.constant 2 : index
    %c0_29 = arith.constant 0 : index
    %69 = vector.load %arg5[%c2_28, %c0_29] : memref<3x128xf32, #tpu.memory_space<vmem>>, vector<1x128xf32>
    %70 = vector.broadcast %69 : vector<1x128xf32> to vector<16x128xf32>
    %71 = arith.addf %68, %70 : vector<16x128xf32>
    %cst_30 = arith.constant 0.000000e+00 : f32
    %72 = vector.broadcast %cst_30 : f32 to vector<16x128xf32>
    %73 = arith.maximumf %71, %72 : vector<16x128xf32>
    %74 = arith.truncf %73 : vector<16x128xf32> to vector<16x128xbf16>
    %c0_31 = arith.constant 0 : index
    %c0_32 = arith.constant 0 : index
    %75 = vector.load %arg6[%c0_31, %c0_32] : memref<128x128xbf16, #tpu.memory_space<vmem>>, vector<128x128xbf16>
    %cst_33 = arith.constant dense<0.000000e+00> : vector<16x128xf32>
    %76 = tpu.matmul %74, %75, %cst_33 {dimension_numbers = #tpu.dot_dimension_numbers<[1], [0], [0], [1], [0, 0, 1, 1], [], []>} : vector<16x128xbf16>, vector<128x128xbf16>, vector<16x128xf32> -> vector<16x128xf32>
    %c0_34 = arith.constant 0 : index
    %c0_35 = arith.constant 0 : index
    %77 = vector.load %arg7[%c0_34, %c0_35] : memref<1x128xf32, #tpu.memory_space<vmem>>, vector<1x128xf32>
    %78 = vector.broadcast %77 : vector<1x128xf32> to vector<16x128xf32>
    %79 = arith.addf %76, %78 : vector<16x128xf32>
    %c0_36 = arith.constant 0 : index
    %c0_37 = arith.constant 0 : index
    %80 = vector.load %arg8[%c0_36, %c0_37] : memref<16x128xf32, #tpu.memory_space<vmem>>, vector<16x128xf32>
    tpu.vector_store %arg8[%c0_36, %c0_37], %79 {strides = array<i32>} : memref<16x128xf32, #tpu.memory_space<vmem>>, vector<16x128xf32>,
    return
  }
  func.func @transform_0(%arg0: i32) -> (i32, i32) {
    %c0_i32 = arith.constant 0 : i32
    %c0_i32_0 = arith.constant 0 : i32
    return %arg0, %c0_i32 : i32, i32
  }
  func.func @transform_1(%arg0: i32) -> (i32, i32) {
    %c0_i32 = arith.constant 0 : i32
    %c0_i32_0 = arith.constant 0 : i32
    %c0_i32_1 = arith.constant 0 : i32
    return %c0_i32, %c0_i32_0 : i32, i32
  }
  func.func @transform_2(%arg0: i32) -> (i32, i32) {
    %c0_i32 = arith.constant 0 : i32
    %c0_i32_0 = arith.constant 0 : i32
    %c0_i32_1 = arith.constant 0 : i32
    return %c0_i32, %c0_i32_0 : i32, i32
  }
  func.func @transform_3(%arg0: i32) -> (i32, i32) {
    %c0_i32 = arith.constant 0 : i32
    %c0_i32_0 = arith.constant 0 : i32
    %c0_i32_1 = arith.constant 0 : i32
    return %c0_i32, %c0_i32_0 : i32, i32
  }
  func.func @transform_4(%arg0: i32) -> (i32, i32) {
    %c0_i32 = arith.constant 0 : i32
    %c0_i32_0 = arith.constant 0 : i32
    %c0_i32_1 = arith.constant 0 : i32
    return %c0_i32, %c0_i32_0 : i32, i32
  }
  func.func @transform_5(%arg0: i32) -> (i32, i32) {
    %c0_i32 = arith.constant 0 : i32
    %c0_i32_0 = arith.constant 0 : i32
    %c0_i32_1 = arith.constant 0 : i32
    return %c0_i32, %c0_i32_0 : i32, i32
  }
  func.func @transform_6(%arg0: i32) -> (i32, i32) {
    %c0_i32 = arith.constant 0 : i32
    %c0_i32_0 = arith.constant 0 : i32
    %c0_i32_1 = arith.constant 0 : i32
    return %c0_i32, %c0_i32_0 : i32, i32
  }
  func.func @transform_7(%arg0: i32) -> (i32, i32) {
    %c0_i32 = arith.constant 0 : i32
    %c0_i32_0 = arith.constant 0 : i32
    return %arg0, %c0_i32 : i32, i32
  }
}

</mosaic_0001>

<llo_original>
// kernel: pi_mlp_forward.1
$region0: #{pi_mlp_forward.1}
  #allocation0 [shape = 'u32[]', space=smem, size = 0x4, offset = 0x4, fixed_abs, tag = 'smem constant byte address 0x4 - core index']
  #allocation1 [shape = 'u32[144,128]{1,0:T(1,128)}', space=vmem, size = 0x12000, scoped, tag = 'internal scratch']
  %s0 = inlined_call_operand.vmem [shape: bf16[16,128], index: 0, kind: input, shape index: {}]
  %s1 = inlined_call_operand.vmem [shape: bf16[128,128], index: 1, kind: input, shape index: {}]
  %s2 = inlined_call_operand.vmem [shape: f32[3,128], index: 2, kind: input, shape index: {}]
  %s3 = inlined_call_operand.vmem [shape: bf16[128,128], index: 3, kind: input, shape index: {}]
  %s4 = inlined_call_operand.vmem [shape: f32[3,128], index: 4, kind: input, shape index: {}]
  %s5 = inlined_call_operand.vmem [shape: bf16[128,128], index: 5, kind: input, shape index: {}]
  %s6 = inlined_call_operand.vmem [shape: f32[1,128], index: 6, kind: input, shape index: {}]
  %s7 = inlined_call_operand.vmem [shape: f32[16,128], index: 7, kind: output, shape index: {}]
  %s8 = sld [smem:[#allocation0]]
  $region38: #{pi_mlp_forward.1} parent=0
    _
  %s10 = ssub.s32 1, %s8
  %s11 = scalar_select 0, %s10, %s8
  // Predicated region
  $region2: #{pi_mlp_forward.1} parent=0 // pred_check
    _
  $region3: #{pi_mlp_forward.1} parent=0 // pred_check_branch
    %13 = sbr.rel (0) target = $region5
  $region4: #{pi_mlp_forward.1} parent=0 // pred_region
    _
  $region5: #{pi_mlp_forward.1} parent=0 // pred_fallthru
    _
  // Predicated region
  $region6: #{pi_mlp_forward.1} parent=0 // pred_check
    _
  $region7: #{pi_mlp_forward.1} parent=0 // pred_check_branch
    %15 = sbr.rel (0) target = $region9
  $region8: #{pi_mlp_forward.1} parent=0 // pred_region
    _
  $region9: #{pi_mlp_forward.1} parent=0 // pred_fallthru
    _
  // Predicated region
  $region10: #{pi_mlp_forward.1} parent=0 // pred_check
    _
  $region11: #{pi_mlp_forward.1} parent=0 // pred_check_branch
    %17 = sbr.rel (0) target = $region13
  $region12: #{pi_mlp_forward.1} parent=0 // pred_region
    _
  $region13: #{pi_mlp_forward.1} parent=0 // pred_fallthru
    _
  // Predicated region
  $region14: #{pi_mlp_forward.1} parent=0 // pred_check
    _
  $region15: #{pi_mlp_forward.1} parent=0 // pred_check_branch
    %19 = sbr.rel (0) target = $region17
  $region16: #{pi_mlp_forward.1} parent=0 // pred_region
    _
  $region17: #{pi_mlp_forward.1} parent=0 // pred_fallthru
    _
  // Predicated region
  $region18: #{pi_mlp_forward.1} parent=0 // pred_check
    _
  $region19: #{pi_mlp_forward.1} parent=0 // pred_check_branch
    %21 = sbr.rel (0) target = $region21
  $region20: #{pi_mlp_forward.1} parent=0 // pred_region
    _
  $region21: #{pi_mlp_forward.1} parent=0 // pred_fallthru
    _
  // Predicated region
  $region22: #{pi_mlp_forward.1} parent=0 // pred_check
    _
  $region23: #{pi_mlp_forward.1} parent=0 // pred_check_branch
    %23 = sbr.rel (0) target = $region25
  $region24: #{pi_mlp_forward.1} parent=0 // pred_region
    _
  $region25: #{pi_mlp_forward.1} parent=0 // pred_fallthru
    _
  // Predicated region
  $region26: #{pi_mlp_forward.1} parent=0 // pred_check
    _
  $region27: #{pi_mlp_forward.1} parent=0 // pred_check_branch
    %25 = sbr.rel (0) target = $region29
  $region28: #{pi_mlp_forward.1} parent=0 // pred_region
    _
  $region29: #{pi_mlp_forward.1} parent=0 // pred_fallthru
    _
  %v27 = vld [vmem:[%s0] sm:$0xf]
  %v28 = vld [vmem:[%s0 + $0x4] sm:$0xf]
  %v29 = vld [vmem:[%s1] sm:$0xf]
  %v30 = vld [vmem:[%s1 + $0x4] sm:$0xf]
  %v31 = vld [vmem:[%s1 + $0x8] sm:$0xf]
  %v32 = vld [vmem:[%s1 + $0xc] sm:$0xf]
  %v33 = vld [vmem:[%s1 + $0x10] sm:$0xf]
  %v34 = vld [vmem:[%s1 + $0x14] sm:$0xf]
  %v35 = vld [vmem:[%s1 + $0x18] sm:$0xf]
  %v36 = vld [vmem:[%s1 + $0x1c] sm:$0xf]
  %v37 = vld [vmem:[%s1 + $0x20] sm:$0xf]
  %v38 = vld [vmem:[%s1 + $0x24] sm:$0xf]
  %v39 = vld [vmem:[%s1 + $0x28] sm:$0xf]
  %v40 = vld [vmem:[%s1 + $0x2c] sm:$0xf]
  %v41 = vld [vmem:[%s1 + $0x30] sm:$0xf]
  %v42 = vld [vmem:[%s1 + $0x34] sm:$0xf]
  %v43 = vld [vmem:[%s1 + $0x38] sm:$0xf]
  %v44 = vld [vmem:[%s1 + $0x3c] sm:$0xf]
  %v45 = vld [vmem:[%s2] sm:$0x1]
  %v46 = vlaneseq
  %v47 = vshrl.u32 %v46, 7
  %v48 = vsub.s32 0, %v47
  %v49 = vrot.slane %v45, %v48
  %v52 = vunpack.c.l.b16 %v27
  %v53 = vunpack.c.l.b16 %v28
  %v54 = vpack.c.b16 %v53, %v52
  %v72 = vunpack.c.l.b16 %v29
  %v73 = vunpack.c.l.b16 %v30
  %v74 = vunpack.c.l.b16 %v31
  %v75 = vunpack.c.l.b16 %v32
  %v76 = vunpack.c.l.b16 %v33
  %v77 = vunpack.c.l.b16 %v34
  %v78 = vunpack.c.l.b16 %v35
  %v79 = vunpack.c.l.b16 %v36
  %v80 = vunpack.c.l.b16 %v37
  %v81 = vunpack.c.l.b16 %v38
  %v82 = vunpack.c.l.b16 %v39
  %v83 = vunpack.c.l.b16 %v40
  %v84 = vunpack.c.l.b16 %v41
  %v85 = vunpack.c.l.b16 %v42
  %v86 = vunpack.c.l.b16 %v43
  %v87 = vunpack.c.l.b16 %v44
  %v88 = vpack.c.b16 %v73, %v72
  %v89 = vpack.c.b16 %v75, %v74
  %v90 = vpack.c.b16 %v77, %v76
  %v91 = vpack.c.b16 %v79, %v78
  %v92 = vpack.c.b16 %v81, %v80
  %v93 = vpack.c.b16 %v83, %v82
  %v94 = vpack.c.b16 %v85, %v84
  %v95 = vpack.c.b16 %v87, %v86
  %104 = vmatprep.subr.bf16.mxu0 0
  %105 = vmatpush1.bf16.msra.mxu0 %v88
  %106 = vmatprep.subr.bf16.mxu0 0
  %107 = vmatpush1.bf16.msra.mxu0 %v89
  %108 = vmatprep.subr.bf16.mxu0 0
  %109 = vmatpush1.bf16.msra.mxu0 %v90
  %110 = vmatprep.subr.bf16.mxu0 0
  %111 = vmatpush1.bf16.msra.mxu0 %v91
  %112 = vmatprep.subr.bf16.mxu0 0
  %113 = vmatpush1.bf16.msra.mxu0 %v92
  %114 = vmatprep.subr.bf16.mxu0 0
  %115 = vmatpush1.bf16.msra.mxu0 %v93
  %116 = vmatprep.subr.bf16.mxu0 0
  %117 = vmatpush1.bf16.msra.mxu0 %v94
  %118 = vmatprep.subr.bf16.mxu0 0
  %119 = vmatpush1.bf16.msra.mxu0 %v95
  %120 = vmatprep.subr.bf16.mxu0 0
  %121 = vmatpush1.bf16.msra.mxu0 0
  %122 = vmatprep.subr.bf16.mxu0 0
  %123 = vmatpush1.bf16.msra.mxu0 0
  %124 = vmatprep.subr.bf16.mxu0 0
  %125 = vmatpush1.bf16.msra.mxu0 0
  %126 = vmatprep.subr.bf16.mxu0 0
  %127 = vmatpush1.bf16.msra.mxu0 0
  %128 = vmatprep.subr.bf16.mxu0 0
  %129 = vmatpush1.bf16.msra.mxu0 0
  %130 = vmatprep.subr.bf16.mxu0 0
  %131 = vmatpush1.bf16.msra.mxu0 0
  %132 = vmatprep.subr.bf16.mxu0 0
  %133 = vmatpush1.bf16.msra.mxu0 0
  %134 = vmatprep.subr.bf16.mxu0 0
  %135 = vmatpush1.bf16.msra.mxu0 0
  %136 = vmatprep.mubr.bf16.mxu0 0
  %137 = vmatmul.mubr.bf16.gmra.mrb[0].mxu0 %v54
  %v138 = vpop.f32.mrb[0].mxu0
  %v139 = vadd.f32 %v49, %v138
  %v140 = vpop.f32.mrb[0].mxu0
  %v141 = vpop.f32.mrb[0].mxu0
  %v142 = vadd.f32 %v49, %v141
  %v143 = vpop.f32.mrb[0].mxu0
  %144 = vdwg.mxu0
  %145 = vadd.xlane.f32.xlu0 %v139
  %v146 = vpop.xlane.xlu0 %145
  %147 = vadd.xlane.f32.xlu0 %v142
  %v148 = vpop.xlane.xlu0 %147
  %v149 = vmul.f32 %v146, 0.03125
  %v150 = vmul.f32 %v148, 0.03125
  %v151 = vsub.f32 %v139, %v149
  %v152 = vsub.f32 %v142, %v150
  %v153 = vlaneseq
  %v154 = vand.u32 %v153, 127
  %vm155 = vcmp.lt.s32.totalorder %v154, 32
  %v156 = vsel %vm155, 1, 0
  %vm157 = vcmp.eq.s32.totalorder %v156, 1
  %v158 = vsel %vm157, %v151, 0.0
  %v159 = vsel %vm157, %v152, 0.0
  %v160 = vmul.f32 %v158, %v158
  %v161 = vmul.f32 %v159, %v159
  %162 = vadd.xlane.f32.xlu0 %v160
  %v163 = vpop.xlane.xlu0 %162
  %164 = vadd.xlane.f32.xlu0 %v161
  %v165 = vpop.xlane.xlu0 %164
  %v166 = vmul.f32 %v163, 0.03125
  %v167 = vmul.f32 %v165, 0.03125
  %v168 = vadd.f32 %v166, 1e-05
  %v169 = vadd.f32 %v167, 1e-05
  %v170 = vrsqrt.pop %v168
  %v171 = vrsqrt.pop %v169
  %v172 = vmul.f32 %v158, %v170
  %v173 = vmul.f32 %v159, %v171
  %v174 = vld [vmem:[%s2 + $0x1] sm:$0x1]
  %v175 = vlaneseq
  %v176 = vshrl.u32 %v175, 7
  %v177 = vsub.s32 0, %v176
  %v178 = vrot.slane %v174, %v177
  %v179 = vmul.f32 %v172, %v178
  %v180 = vmul.f32 %v173, %v178
  %v181 = vld [vmem:[%s2 + $0x2] sm:$0x1]
  %v182 = vlaneseq
  %v183 = vshrl.u32 %v182, 7
  %v184 = vsub.s32 0, %v183
  %v185 = vrot.slane %v181, %v184
  %v186 = vadd.f32 %v179, %v185
  %v187 = vadd.f32 %v180, %v185
  %v188 = vmax.f32 %v186, 0.0
  %v189 = vmax.f32 %v187, 0.0
  %v190 = vpack.c.bf16 %v189, %v188
  %v191 = vld [vmem:[%s3] sm:$0xf]
  %v192 = vld [vmem:[%s3 + $0x4] sm:$0xf]
  %v193 = vld [vmem:[%s3 + $0x8] sm:$0xf]
  %v194 = vld [vmem:[%s3 + $0xc] sm:$0xf]
  %v195 = vld [vmem:[%s3 + $0x10] sm:$0xf]
  %v196 = vld [vmem:[%s3 + $0x14] sm:$0xf]
  %v197 = vld [vmem:[%s3 + $0x18] sm:$0xf]
  %v198 = vld [vmem:[%s3 + $0x1c] sm:$0xf]
  %v199 = vld [vmem:[%s3 + $0x20] sm:$0xf]
  %v200 = vld [vmem:[%s3 + $0x24] sm:$0xf]
  %v201 = vld [vmem:[%s3 + $0x28] sm:$0xf]
  %v202 = vld [vmem:[%s3 + $0x2c] sm:$0xf]
  %v203 = vld [vmem:[%s3 + $0x30] sm:$0xf]
  %v204 = vld [vmem:[%s3 + $0x34] sm:$0xf]
  %v205 = vld [vmem:[%s3 + $0x38] sm:$0xf]
  %v206 = vld [vmem:[%s3 + $0x3c] sm:$0xf]
  %v207 = vld [vmem:[%s4] sm:$0x1]
  %v208 = vlaneseq
  %v209 = vshrl.u32 %v208, 7
  %v210 = vsub.s32 0, %v209
  %v211 = vrot.slane %v207, %v210
  %v228 = vunpack.c.l.b16 %v191
  %v229 = vunpack.c.l.b16 %v192
  %v230 = vunpack.c.l.b16 %v193
  %v231 = vunpack.c.l.b16 %v194
  %v232 = vunpack.c.l.b16 %v195
  %v233 = vunpack.c.l.b16 %v196
  %v234 = vunpack.c.l.b16 %v197
  %v235 = vunpack.c.l.b16 %v198
  %v236 = vunpack.c.l.b16 %v199
  %v237 = vunpack.c.l.b16 %v200
  %v238 = vunpack.c.l.b16 %v201
  %v239 = vunpack.c.l.b16 %v202
  %v240 = vunpack.c.l.b16 %v203
  %v241 = vunpack.c.l.b16 %v204
  %v242 = vunpack.c.l.b16 %v205
  %v243 = vunpack.c.l.b16 %v206
  %v244 = vpack.c.b16 %v229, %v228
  %v245 = vpack.c.b16 %v231, %v230
  %v246 = vpack.c.b16 %v233, %v232
  %v247 = vpack.c.b16 %v235, %v234
  %v248 = vpack.c.b16 %v237, %v236
  %v249 = vpack.c.b16 %v239, %v238
  %v250 = vpack.c.b16 %v241, %v240
  %v251 = vpack.c.b16 %v243, %v242
  %260 = vmatprep.subr.bf16.mxu0 0
  %261 = vmatpush1.bf16.msra.mxu0 %v244
  %262 = vmatprep.subr.bf16.mxu0 0
  %263 = vmatpush1.bf16.msra.mxu0 %v245
  %264 = vmatprep.subr.bf16.mxu0 0
  %265 = vmatpush1.bf16.msra.mxu0 %v246
  %266 = vmatprep.subr.bf16.mxu0 0
  %267 = vmatpush1.bf16.msra.mxu0 %v247
  %268 = vmatprep.subr.bf16.mxu0 0
  %269 = vmatpush1.bf16.msra.mxu0 %v248
  %270 = vmatprep.subr.bf16.mxu0 0
  %271 = vmatpush1.bf16.msra.mxu0 %v249
  %272 = vmatprep.subr.bf16.mxu0 0
  %273 = vmatpush1.bf16.msra.mxu0 %v250
  %274 = vmatprep.subr.bf16.mxu0 0
  %275 = vmatpush1.bf16.msra.mxu0 %v251
  %276 = vmatprep.subr.bf16.mxu0 0
  %277 = vmatpush1.bf16.msra.mxu0 0
  %278 = vmatprep.subr.bf16.mxu0 0
  %279 = vmatpush1.bf16.msra.mxu0 0
  %280 = vmatprep.subr.bf16.mxu0 0
  %281 = vmatpush1.bf16.msra.mxu0 0
  %282 = vmatprep.subr.bf16.mxu0 0
  %283 = vmatpush1.bf16.msra.mxu0 0
  %284 = vmatprep.subr.bf16.mxu0 0
  %285 = vmatpush1.bf16.msra.mxu0 0
  %286 = vmatprep.subr.bf16.mxu0 0
  %287 = vmatpush1.bf16.msra.mxu0 0
  %288 = vmatprep.subr.bf16.mxu0 0
  %289 = vmatpush1.bf16.msra.mxu0 0
  %290 = vmatprep.subr.bf16.mxu0 0
  %291 = vmatpush1.bf16.msra.mxu0 0
  %292 = vmatprep.mubr.bf16.mxu0 0
  %293 = vmatmul.mubr.bf16.gmra.mrb[0].mxu0 %v190
  %v294 = vpop.f32.mrb[0].mxu0
  %v295 = vadd.f32 %v211, %v294
  %v296 = vpop.f32.mrb[0].mxu0
  %v297 = vpop.f32.mrb[0].mxu0
  %v298 = vadd.f32 %v211, %v297
  %v299 = vpop.f32.mrb[0].mxu0
  %300 = vdwg.mxu0
  %301 = vadd.xlane.f32.xlu0 %v295
  %v302 = vpop.xlane.xlu0 %301
  %303 = vadd.xlane.f32.xlu0 %v298
  %v304 = vpop.xlane.xlu0 %303
  %v305 = vmul.f32 %v302, 0.03125
  %v306 = vmul.f32 %v304, 0.03125
  %v307 = vsub.f32 %v295, %v305
  %v308 = vsub.f32 %v298, %v306
  %v309 = vsel %vm157, %v307, 0.0
  %v310 = vsel %vm157, %v308, 0.0
  %v311 = vmul.f32 %v309, %v309
  %v312 = vmul.f32 %v310, %v310
  %313 = vadd.xlane.f32.xlu0 %v311
  %v314 = vpop.xlane.xlu0 %313
  %315 = vadd.xlane.f32.xlu0 %v312
  %v316 = vpop.xlane.xlu0 %315
  %v317 = vmul.f32 %v314, 0.03125
  %v318 = vmul.f32 %v316, 0.03125
  %v319 = vadd.f32 %v317, 1e-05
  %v320 = vadd.f32 %v318, 1e-05
  %v321 = vrsqrt.pop %v319
  %v322 = vrsqrt.pop %v320
  %v323 = vmul.f32 %v309, %v321
  %v324 = vmul.f32 %v310, %v322
  %v325 = vld [vmem:[%s4 + $0x1] sm:$0x1]
  %v326 = vlaneseq
  %v327 = vshrl.u32 %v326, 7
  %v328 = vsub.s32 0, %v327
  %v329 = vrot.slane %v325, %v328
  %v330 = vmul.f32 %v323, %v329
  %v331 = vmul.f32 %v324, %v329
  %v332 = vld [vmem:[%s4 + $0x2] sm:$0x1]
  %v333 = vlaneseq
  %v334 = vshrl.u32 %v333, 7
  %v335 = vsub.s32 0, %v334
  %v336 = vrot.slane %v332, %v335
  %v337 = vadd.f32 %v330, %v336
  %v338 = vadd.f32 %v331, %v336
  %v339 = vmax.f32 %v337, 0.0
  %v340 = vmax.f32 %v338, 0.0
  %v341 = vpack.c.bf16 %v340, %v339
  %v342 = vld [vmem:[%s5] sm:$0xf]
  %v343 = vld [vmem:[%s5 + $0x4] sm:$0xf]
  %v344 = vld [vmem:[%s5 + $0x8] sm:$0xf]
  %v345 = vld [vmem:[%s5 + $0xc] sm:$0xf]
  %v346 = vld [vmem:[%s5 + $0x10] sm:$0xf]
  %v347 = vld [vmem:[%s5 + $0x14] sm:$0xf]
  %v348 = vld [vmem:[%s5 + $0x18] sm:$0xf]
  %v349 = vld [vmem:[%s5 + $0x1c] sm:$0xf]
  %v350 = vld [vmem:[%s5 + $0x20] sm:$0xf]
  %v351 = vld [vmem:[%s5 + $0x24] sm:$0xf]
  %v352 = vld [vmem:[%s5 + $0x28] sm:$0xf]
  %v353 = vld [vmem:[%s5 + $0x2c] sm:$0xf]
  %v354 = vld [vmem:[%s5 + $0x30] sm:$0xf]
  %v355 = vld [vmem:[%s5 + $0x34] sm:$0xf]
  %v356 = vld [vmem:[%s5 + $0x38] sm:$0xf]
  %v357 = vld [vmem:[%s5 + $0x3c] sm:$0xf]
  %v358 = vld [vmem:[%s6] sm:$0x1]
  %v360 = vlaneseq
  %v361 = vshrl.u32 %v360, 7
  %v362 = vsub.s32 0, %v361
  %v363 = vrot.slane %v358, %v362
  %v381 = vunpack.c.l.b16 %v342
  %v382 = vunpack.c.l.b16 %v343
  %v383 = vunpack.c.l.b16 %v344
  %v384 = vunpack.c.l.b16 %v345
  %v385 = vunpack.c.l.b16 %v346
  %v386 = vunpack.c.l.b16 %v347
  %v387 = vunpack.c.l.b16 %v348
  %v388 = vunpack.c.l.b16 %v349
  %v389 = vunpack.c.l.b16 %v350
  %v390 = vunpack.c.l.b16 %v351
  %v391 = vunpack.c.l.b16 %v352
  %v392 = vunpack.c.l.b16 %v353
  %v393 = vunpack.c.l.b16 %v354
  %v394 = vunpack.c.l.b16 %v355
  %v395 = vunpack.c.l.b16 %v356
  %v396 = vunpack.c.l.b16 %v357
  %v397 = vpack.c.b16 %v382, %v381
  %v398 = vpack.c.b16 %v384, %v383
  %v399 = vpack.c.b16 %v386, %v385
  %v400 = vpack.c.b16 %v388, %v387
  %v401 = vpack.c.b16 %v390, %v389
  %v402 = vpack.c.b16 %v392, %v391
  %v403 = vpack.c.b16 %v394, %v393
  %v404 = vpack.c.b16 %v396, %v395
  %413 = vmatprep.subr.bf16.mxu0 0
  %414 = vmatpush1.bf16.msra.mxu0 %v397
  %415 = vmatprep.subr.bf16.mxu0 0
  %416 = vmatpush1.bf16.msra.mxu0 %v398
  %417 = vmatprep.subr.bf16.mxu0 0
  %418 = vmatpush1.bf16.msra.mxu0 %v399
  %419 = vmatprep.subr.bf16.mxu0 0
  %420 = vmatpush1.bf16.msra.mxu0 %v400
  %421 = vmatprep.subr.bf16.mxu0 0
  %422 = vmatpush1.bf16.msra.mxu0 %v401
  %423 = vmatprep.subr.bf16.mxu0 0
  %424 = vmatpush1.bf16.msra.mxu0 %v402
  %425 = vmatprep.subr.bf16.mxu0 0
  %426 = vmatpush1.bf16.msra.mxu0 %v403
  %427 = vmatprep.subr.bf16.mxu0 0
  %428 = vmatpush1.bf16.msra.mxu0 %v404
  %429 = vmatprep.subr.bf16.mxu0 0
  %430 = vmatpush1.bf16.msra.mxu0 0
  %431 = vmatprep.subr.bf16.mxu0 0
  %432 = vmatpush1.bf16.msra.mxu0 0
  %433 = vmatprep.subr.bf16.mxu0 0
  %434 = vmatpush1.bf16.msra.mxu0 0
  %435 = vmatprep.subr.bf16.mxu0 0
  %436 = vmatpush1.bf16.msra.mxu0 0
  %437 = vmatprep.subr.bf16.mxu0 0
  %438 = vmatpush1.bf16.msra.mxu0 0
  %439 = vmatprep.subr.bf16.mxu0 0
  %440 = vmatpush1.bf16.msra.mxu0 0
  %441 = vmatprep.subr.bf16.mxu0 0
  %442 = vmatpush1.bf16.msra.mxu0 0
  %443 = vmatprep.subr.bf16.mxu0 0
  %444 = vmatpush1.bf16.msra.mxu0 0
  %445 = vmatprep.mubr.bf16.mxu0 0
  %446 = vmatmul.mubr.bf16.gmra.mrb[0].mxu0 %v341
  %v447 = vpop.f32.mrb[0].mxu0
  %v448 = vadd.f32 %v363, %v447
  %v449 = vpop.f32.mrb[0].mxu0
  %v450 = vpop.f32.mrb[0].mxu0
  %v451 = vadd.f32 %v363, %v450
  %v452 = vpop.f32.mrb[0].mxu0
  %453 = vdwg.mxu0
  %454 = vst [vmem:[%s7] sm:$0xff] %v448
  %455 = vst [vmem:[%s7 + $0x8] sm:$0xff] %v451
  // Predicated region
  $region30: #{pi_mlp_forward.1} parent=0 // pred_check
    _
  $region31: #{pi_mlp_forward.1} parent=0 // pred_check_branch
    %457 = sbr.rel (0) target = $region33
  $region32: #{pi_mlp_forward.1} parent=0 // pred_region
    _
  $region33: #{pi_mlp_forward.1} parent=0 // pred_fallthru
    _
  // Predicated region
  $region34: #{pi_mlp_forward.1} parent=0 // pred_check
    _
  $region35: #{pi_mlp_forward.1} parent=0 // pred_check_branch
    %459 = sbr.rel (0) target = $region37
  $region36: #{pi_mlp_forward.1} parent=0 // pred_region
    _
  $region37: #{pi_mlp_forward.1} parent=0 // pred_fallthru
    _

</llo_original>
